<compile_context>
chip_gen: v5e
topology: v5e:2x2
jax: 0.10.0
libtpu: 0.0.40
codegen_flags: <defaults>
</compile_context>

<pallas_src>
import functools

import jax
import jax.numpy as jnp
import numpy as np
from jax.experimental import pallas as pl
from jax.experimental.pallas import tpu as pltpu


def _embeddings_kernel(p_ref, w_ref, pos_ref, o_ref):
    # p_ref:   (TM, Kp)  bf16 im2col patch rows for this grid step
    # w_ref:   (Kp, D)   bf16 flattened Conv3d weight (constant block index ->
    #                    DMA'd once, revisits skipped by the pipeline)
    # pos_ref: (TM, D)   bf16 position embedding with conv bias folded in
    # o_ref:   (TM, D)   output block
    acc = jnp.dot(p_ref[...], w_ref[...], preferred_element_type=jnp.float32)
    o_ref[...] = (acc + pos_ref[...].astype(jnp.float32)).astype(o_ref.dtype)


def _vmem_config():
    """Generation-aware tiling budget."""
    try:
        cap = int(pltpu.get_tpu_info().vmem_capacity_bytes)
    except Exception:
        cap = 64 * 1024 * 1024  # unknown -> assume v7x-sized (conservative)
    if cap >= 100 * 1024 * 1024:
        # v5e / v6e: 128 MiB physical VMEM -> go for 512-2048 row tiles.
        return dict(vmem_budget=64 * 1024 * 1024, max_rows=2048,
                    vmem_limit_bytes=96 * 1024 * 1024)
    # v7x: 64 MiB per TensorCore -> stay conservative.
    return dict(vmem_budget=24 * 1024 * 1024, max_rows=1024,
                vmem_limit_bytes=32 * 1024 * 1024)


def _pick_tm(m_per_batch, batch, k, d, *, in_bytes, pos_bytes, out_bytes,
             vmem_budget, max_rows):
    """Largest row-block TM such that:
       - TM divides m_per_batch and (TM % 8 == 0 or TM == m_per_batch)
         (satisfies the (8,128) second-minor constraint: 8-aligned OR full dim),
       - TM <= max_rows and the double-buffered block footprint fits the budget,
       - prefers configs that leave >= 2 grid blocks (keeps both v7x TCs busy)."""
    def footprint(tm):
        return (2 * tm * k * in_bytes       # patch block (double buffered)
                + 2 * k * d * in_bytes      # weight (constant index, still 2x)
                + 2 * tm * d * pos_bytes    # position embedding block
                + 2 * tm * d * out_bytes)   # output block

    legal = [tm for tm in range(1, m_per_batch + 1)
             if m_per_batch % tm == 0 and (tm % 8 == 0 or tm == m_per_batch)]
    fitting = [tm for tm in legal if tm <= max_rows and footprint(tm) <= vmem_budget]
    if not fitting:
        return min(legal)               # pathological shape: smallest legal block
    multi = [tm for tm in fitting if batch * (m_per_batch // tm) >= 2]
    return max(multi if multi else fitting)


def vivit_embeddings(x, conv_w, conv_b, pos_emb, *, t, ph, pw,
                     compute_dtype=jnp.bfloat16, out_dtype=None,
                     channels_first=None):
    # Layout fix-up mirroring the PyTorch forward (`if x.shape[-4] != 3`).
    # Pass `channels_first` explicitly to avoid the T == 3 ambiguity of the
    # original heuristic.
    if channels_first is None:
        channels_first = (x.shape[-4] == 3)
    if not channels_first:
        x = jnp.swapaxes(x, -3, -4)
    B, C, T, H, W = x.shape
    D = conv_w.shape[0]
    assert T % t == 0 and H % ph == 0 and W % pw == 0
    n_t, gh, gw = T // t, H // ph, W // pw
    n_patches = gh * gw
    M = n_t * n_patches                  # patch rows per batch element
    K = C * t * ph * pw
    out_dtype = x.dtype if out_dtype is None else out_dtype

    # im2col: non-overlapping 3D tubelets -> K-vectors ordered (C, t, ph, pw),
    # matching Conv3d's reduction order.  Pure data movement; with
    # allow_input_fusion below XLA may fuse this relayout + bf16 cast into the
    # kernel's input pipeline instead of materializing it in HBM.
    xp = x.reshape(B, C, n_t, t, gh, ph, gw, pw)
    xp = xp.transpose(0, 2, 4, 6, 1, 3, 5, 7)        # (B, n_t, gh, gw, C, t, ph, pw)
    patches = xp.reshape(B, M, K).astype(compute_dtype)
    w_mat = conv_w.reshape(D, K).T.astype(compute_dtype)        # (K, D)

    # Lane-align the contraction dim (keeps MXU feeding full on v5e and avoids
    # masked partial loads; a no-op for real ViViT K=1536).
    Kp = ((K + 127) // 128) * 128 if K % 128 else K
    if Kp != K:
        patches = jnp.pad(patches, ((0, 0), (0, 0), (0, Kp - K)))
        w_mat = jnp.pad(w_mat, ((0, Kp - K), (0, 0)))

    # Fold the conv bias into the batch-invariant position embedding; feed it
    # in bf16 (upcast in-kernel) to halve its HBM/DMA bytes.
    pos = (pos_emb.reshape(M, D).astype(jnp.float32)
           + conv_b.reshape(1, D).astype(jnp.float32)).astype(compute_dtype)

    cfg = _vmem_config()
    TM = _pick_tm(M, B, Kp, D,
                  in_bytes=jnp.dtype(compute_dtype).itemsize,
                  pos_bytes=jnp.dtype(compute_dtype).itemsize,
                  out_bytes=jnp.dtype(out_dtype).itemsize,
                  vmem_budget=cfg["vmem_budget"], max_rows=cfg["max_rows"])
    q = M // TM                          # position-embedding blocks per batch

    cost = pl.CostEstimate(
        flops=2 * B * M * Kp * D,
        transcendentals=0,
        bytes_accessed=(patches.size * patches.dtype.itemsize
                        + w_mat.size * w_mat.dtype.itemsize
                        + pos.size * pos.dtype.itemsize
                        + B * M * D * jnp.dtype(out_dtype).itemsize))

    out = pl.pallas_call(
        _embeddings_kernel,
        out_shape=jax.ShapeDtypeStruct((B, M, D), out_dtype),
        # Grid (q, B): the batch axis iterates fastest, so the batch-invariant
        # position-embedding block (index j) only changes q times and is not
        # re-DMA'd per batch element.  Both axes are independent output tiles.
        grid=(q, B),
        in_specs=[
            pl.BlockSpec((None, TM, Kp), lambda j, b: (b, j, 0)),
            pl.BlockSpec((Kp, D), lambda j, b: (0, 0)),
            pl.BlockSpec((TM, D), lambda j, b: (j, 0)),
        ],
        out_specs=pl.BlockSpec((None, TM, D), lambda j, b: (b, j, 0)),
        compiler_params=pltpu.CompilerParams(
            dimension_semantics=("parallel", "parallel"),
            vmem_limit_bytes=cfg["vmem_limit_bytes"],
            # Allow the im2col transpose / bf16 cast / K-pad of `patches` to
            # fuse into the kernel's input pipeline (no extra HBM round trip).
            allow_input_fusion=[True, False, False],
        ),
        cost_estimate=cost,
    )(patches, w_mat, pos)

    # TODO(synk): dropout is applied as eval-mode identity (no RNG masking).
    return out.reshape(B, n_t, n_patches, D)


if __name__ == "__main__":
    # Small, forward-consistent shapes (non-hybrid path):
    #   img_size=16, config.patches.size=(4,4), config.t=2, seq_len=4,
    #   hidden_size=128 (lane-dense), in_channels=3.
    B, C, T, H, W = 2, 3, 4, 16, 16
    t, ph, pw = 2, 4, 4
    D = 128
    n_t = T // t
    n_patches = (H // ph) * (W // pw)

    key = jax.random.PRNGKey(0)
    kx, kw, kb, kp = jax.random.split(key, 4)
    x = jax.random.normal(kx, (B, C, T, H, W), dtype=jnp.float32)
    conv_w = 0.05 * jax.random.normal(kw, (D, C, t, ph, pw), dtype=jnp.float32)
    conv_b = 0.05 * jax.random.normal(kb, (D,), dtype=jnp.float32)
    # nn.Parameter(torch.zeros(...)) in the module; small random values here so
    # the position-embedding add path is actually exercised.
    pos_emb = 0.05 * jax.random.normal(kp, (1, n_t, n_patches, D), dtype=jnp.float32)

    fn = jax.jit(functools.partial(vivit_embeddings, t=t, ph=ph, pw=pw))
    out = jax.block_until_ready(fn(x, conv_w, conv_b, pos_emb))

    # Reference: true 3D convolution + flatten/permute + position embedding (f32).
    conv_out = jax.lax.conv_general_dilated(
        x, conv_w, window_strides=(t, ph, pw), padding="VALID",
        dimension_numbers=("NCDHW", "OIDHW", "NCDHW"))
    conv_out = conv_out + conv_b[None, :, None, None, None]
    ref = conv_out.reshape(B, D, n_t, n_patches).transpose(0, 2, 3, 1) + pos_emb[0]

    # bf16 inputs / f32 accumulation => relaxed tolerance vs the all-f32 reference.
    np.testing.assert_allclose(np.asarray(out), np.asarray(ref), rtol=2e-2, atol=2e-2)
    print("KERNEL_OK")
</pallas_src>

<mosaic_0001>
module attributes {stable_mosaic.version = 11 : i64} {
  func.func @_embeddings_kernel(%arg0: i32, %arg1: i32, %arg2: memref<1x32x128xbf16, #tpu.memory_space<vmem>>, %arg3: memref<128x128xbf16, #tpu.memory_space<vmem>>, %arg4: memref<32x128xbf16, #tpu.memory_space<vmem>>, %arg5: memref<1x32x128xf32, #tpu.memory_space<vmem>>) attributes {dimension_semantics = [#tpu.dimension_semantics<parallel>, #tpu.dimension_semantics<parallel>], iteration_bounds = array<i64: 1, 2>, scalar_prefetch = 0 : i64, scratch_operands = 0 : i64, tpu.core_type = #tpu.core_type<tc>, window_params = [{transform_indices = @transform_0, window_bounds = array<i64: 1, 32, 128>}, {pipeline_mode = #tpu.pipeline_mode<synchronous>, transform_indices = @transform_1, window_bounds = array<i64: 128, 128>}, {transform_indices = @transform_2, window_bounds = array<i64: 32, 128>}, {transform_indices = @transform_3, window_bounds = array<i64: 1, 32, 128>}]} {
    %c0 = arith.constant 0 : index
    %c0_0 = arith.constant 0 : index
    %c0_1 = arith.constant 0 : index
    %0 = vector.load %arg2[%c0, %c0_0, %c0_1] : memref<1x32x128xbf16, #tpu.memory_space<vmem>>, vector<1x32x128xbf16>
    %1 = vector.shape_cast %0 : vector<1x32x128xbf16> to vector<32x128xbf16>
    %c0_2 = arith.constant 0 : index
    %c0_3 = arith.constant 0 : index
    %2 = vector.load %arg3[%c0_2, %c0_3] : memref<128x128xbf16, #tpu.memory_space<vmem>>, vector<128x128xbf16>
    %cst = arith.constant dense<0.000000e+00> : vector<32x128xf32>
    %3 = tpu.matmul %1, %2, %cst {dimension_numbers = #tpu.dot_dimension_numbers<[1], [0], [0], [1], [0, 0, 1, 1], [], []>} : vector<32x128xbf16>, vector<128x128xbf16>, vector<32x128xf32> -> vector<32x128xf32>
    %c0_4 = arith.constant 0 : index
    %c0_5 = arith.constant 0 : index
    %4 = vector.load %arg4[%c0_4, %c0_5] : memref<32x128xbf16, #tpu.memory_space<vmem>>, vector<32x128xbf16>
    %5 = arith.extf %4 : vector<32x128xbf16> to vector<32x128xf32>
    %6 = arith.addf %3, %5 : vector<32x128xf32>
    %c0_6 = arith.constant 0 : index
    %c0_7 = arith.constant 0 : index
    %c0_8 = arith.constant 0 : index
    %7 = vector.load %arg5[%c0_6, %c0_7, %c0_8] : memref<1x32x128xf32, #tpu.memory_space<vmem>>, vector<1x32x128xf32>
    %8 = vector.shape_cast %7 : vector<1x32x128xf32> to vector<32x128xf32>
    %9 = vector.shape_cast %6 : vector<32x128xf32> to vector<1x32x128xf32>
    tpu.vector_store %arg5[%c0_6, %c0_7, %c0_8], %9 {strides = array<i32>} : memref<1x32x128xf32, #tpu.memory_space<vmem>>, vector<1x32x128xf32>,
    return
  }
  func.func @transform_0(%arg0: i32, %arg1: i32) -> (i32, i32, i32) {
    %c0_i32 = arith.constant 0 : i32
    %c0_i32_0 = arith.constant 0 : i32
    return %arg1, %arg0, %c0_i32 : i32, i32, i32
  }
  func.func @transform_1(%arg0: i32, %arg1: i32) -> (i32, i32) {
    %c0_i32 = arith.constant 0 : i32
    %c0_i32_0 = arith.constant 0 : i32
    %c0_i32_1 = arith.constant 0 : i32
    return %c0_i32, %c0_i32_0 : i32, i32
  }
  func.func @transform_2(%arg0: i32, %arg1: i32) -> (i32, i32) {
    %c0_i32 = arith.constant 0 : i32
    %c0_i32_0 = arith.constant 0 : i32
    return %arg0, %c0_i32 : i32, i32
  }
  func.func @transform_3(%arg0: i32, %arg1: i32) -> (i32, i32, i32) {
    %c0_i32 = arith.constant 0 : i32
    %c0_i32_0 = arith.constant 0 : i32
    return %arg1, %arg0, %c0_i32 : i32, i32, i32
  }
}

</mosaic_0001>

<llo_original>
// kernel: vivit_embeddings.2
$region0: #{vivit_embeddings.2}
  #allocation0 [shape = 'u32[]', space=smem, size = 0x4, offset = 0x4, fixed_abs, tag = 'smem constant byte address 0x4 - core index']
  #allocation1 [shape = 'u32[72,128]{1,0:T(1,128)}', space=vmem, size = 0x9000, scoped, tag = 'internal scratch']
  #allocation2 [shape = 'u32[2048]{0}', space=vmem, size = 0x2000, scoped, tag = 'scoped memory for vivit_embeddings.2']
  #allocation3 [shape = 'u32[2048]{0}', space=vmem, size = 0x2000, scoped, tag = 'scoped memory for vivit_embeddings.2']
  #allocation4 [shape = 'u32[2048]{0}', space=vmem, size = 0x2000, scoped, tag = 'scoped memory for vivit_embeddings.2']
  #allocation5 [shape = 'u32[2048]{0}', space=vmem, size = 0x2000, scoped, tag = 'scoped memory for vivit_embeddings.2']
  #allocation6 [shape = 'u32[2048]{0}', space=vmem, size = 0x2000, scoped, tag = 'scoped memory for vivit_embeddings.2']
  %s0 = inlined_call_operand.vmem [shape: bf16[128,128], index: 0, kind: input, shape index: {}]
  %s1 = inlined_call_operand.vmem [shape: bf16[32,128], index: 1, kind: input, shape index: {}]
  %s2 = inlined_call_operand.vmem [shape: bf16[2,32,96], index: 2, kind: input, shape index: {}]
  %s3 = inlined_call_operand.<no memory space> [shape: bf16[], index: 3, kind: input, shape index: {}]
  %s4 = inlined_call_operand.hbm [shape: f32[2,32,128], index: 4, kind: output, shape index: {}]
  %s5 = sld [smem:[#allocation0]]
  $region45: #{vivit_embeddings.2} parent=0
    _
  %s7 = ssub.s32 1, %s5
  %s8 = scalar_select 0, %s7, %s5
  %v9 = vstv %s3
  %v10 = vunpack.i.l.bf16 %v9
  %v12 = vunpack.i.h.bf16 %v9
  $region1: #{vivit_embeddings.2} parent=0
    #allocation7 [shape = 'u8[32768]{0}', space=vmem, size = 0x8000, scoped, tag = 'output window, operand 0']
    #allocation8 [shape = 's32[2]{0}', space=sflag, size = 0x8, scoped, tag = 'scoped memory for vivit_embeddings.2']
    %14 = vsyncpa [#allocation8], 0
    %s15 = scalar_lea.sflag [#allocation8], 1
    %16 = vsyncpa %s15, 0
    loop: start=0, step=1, limit=4
    $region2: #{vivit_embeddings.2} parent=1 // loop_pre_header
      _
    $region3: #{vivit_embeddings.2} parent=1 // loop_header
      %s18 = sphi 0, %s22
      %p19 = scmp.ge.s32.totalorder %s18, 4
      %s25 = sphi 0, %s37
      %s26 = sphi 0, %s33
      %s27 = sphi 0, %s25
      %s28 = sphi 0, %s26
      %s29 = sphi 0, %s27
      %s30 = sphi 0, %s28
      %s42 = sphi 0, %s44
      %s45 = sphi 0, %s42
      %s46 = sphi 0, %s45
      %s62 = sphi 0, %s46
      %s66 = sphi 0, %s66
      %s68 = sphi 0, %s66
      %s69 = sphi 0, %s68
      %s83 = sphi 0, %s69
      %s89 = sphi 0, %s91
      %s92 = sphi 0, %s89
      %s93 = sphi 0, %s92
      %s109 = sphi 0, %s93
      %s117 = sphi 0, %s119
      %s120 = sphi 0, %s117
      %s121 = sphi 0, %s120
      %s137 = sphi 0, %s121
    $region4: #{vivit_embeddings.2} parent=1 // loop_header_branch
      %21 = sbr.rel (%p19) target = $region8
    $region5: #{vivit_embeddings.2} parent=1 // loop_body
      %s23 = ssub.s32 %s18, 1
      %s24 = ssub.s32 %s18, 2
      %s31 = sadd.s32 1, %s26
      %p32 = scmp.ge.s32.totalorder %s31, 2
      %s33 = scalar_select %p32, 0, %s31
      %s34 = sadd.s32 1, %s25
      %s35 = scalar_select %p32, %s34, %s25
      %p36 = scmp.ge.s32.totalorder %s35, 1
      %s37 = scalar_select %p36, 0, %s35
      %s38 = ssub.s32 %s26, %s33
      %s39 = ssub.s32 %s25, %s37
      %s40 = sor.u32 %s38, %s39
      %p41 = scmp.eq.s32.totalorder %s40, 0
      %s43 = sadd.s32 %s42, 1
      %s44 = scalar_select %p41, %s42, %s43
      %p47 = pneg %p41
      %p48 = scmp.eq.s32.totalorder %s18, 1
      %p49 = por %p47, %p48
      %p50 = scmp.ne.s32.totalorder %s42, %s45
      %p51 = scmp.eq.s32.totalorder %s18, 0
      %p52 = por %p50, %p51
      %p53 = scmp.ne.s32.totalorder %s42, %s45
      %p54 = scmp.eq.s32.totalorder %s23, 1
      %p55 = por %p53, %p54
      %p56 = scmp.ne.s32.totalorder %s45, %s46
      %p57 = scmp.eq.s32.totalorder %s23, 0
      %p58 = por %p56, %p57
      %p59 = scmp.ne.s32.totalorder %s45, %s46
      %p60 = scmp.eq.s32.totalorder %s24, 1
      %p61 = por %p59, %p60
      %p63 = scmp.ne.s32.totalorder %s46, %s62
      %p64 = scmp.eq.s32.totalorder %s24, 0
      %p65 = por %p63, %p64
      %s67 = sadd.s32 %s66, 1
      %p70 = scmp.eq.s32.totalorder %s18, 1
      %p71 = scmp.ne.s32.totalorder %s66, %s68
      %p72 = scmp.eq.s32.totalorder %s18, 0
      %p73 = por %p71, %p72
      %p74 = scmp.ne.s32.totalorder %s66, %s68
      %p75 = scmp.eq.s32.totalorder %s23, 1
      %p76 = por %p74, %p75
      %p77 = scmp.ne.s32.totalorder %s68, %s69
      %p78 = scmp.eq.s32.totalorder %s23, 0
      %p79 = por %p77, %p78
      %p80 = scmp.ne.s32.totalorder %s68, %s69
      %p81 = scmp.eq.s32.totalorder %s24, 1
      %p82 = por %p80, %p81
      %p84 = scmp.ne.s32.totalorder %s69, %s83
      %p85 = scmp.eq.s32.totalorder %s24, 0
      %p86 = por %p84, %p85
      %s87 = ssub.s32 %s25, %s37
      %p88 = scmp.eq.s32.totalorder %s87, 0
      %s90 = sadd.s32 %s89, 1
      %s91 = scalar_select %p88, %s89, %s90
      %p94 = pneg %p88
      %p95 = scmp.eq.s32.totalorder %s18, 1
      %p96 = por %p94, %p95
      %p97 = scmp.ne.s32.totalorder %s89, %s92
      %p98 = scmp.eq.s32.totalorder %s18, 0
      %p99 = por %p97, %p98
      %p100 = scmp.ne.s32.totalorder %s89, %s92
      %p101 = scmp.eq.s32.totalorder %s23, 1
      %p102 = por %p100, %p101
      %p103 = scmp.ne.s32.totalorder %s92, %s93
      %p104 = scmp.eq.s32.totalorder %s23, 0
      %p105 = por %p103, %p104
      %p106 = scmp.ne.s32.totalorder %s92, %s93
      %p107 = scmp.eq.s32.totalorder %s24, 1
      %p108 = por %p106, %p107
      %p110 = scmp.ne.s32.totalorder %s93, %s109
      %p111 = scmp.eq.s32.totalorder %s24, 0
      %p112 = por %p110, %p111
      %s113 = ssub.s32 %s26, %s33
      %s114 = ssub.s32 %s25, %s37
      %s115 = sor.u32 %s113, %s114
      %p116 = scmp.eq.s32.totalorder %s115, 0
      %s118 = sadd.s32 %s117, 1
      %s119 = scalar_select %p116, %s117, %s118
      %p122 = pneg %p116
      %p123 = scmp.eq.s32.totalorder %s18, 1
      %p124 = por %p122, %p123
      %p125 = scmp.ne.s32.totalorder %s117, %s120
      %p126 = scmp.eq.s32.totalorder %s18, 0
      %p127 = por %p125, %p126
      %p128 = scmp.ne.s32.totalorder %s117, %s120
      %p129 = scmp.eq.s32.totalorder %s23, 1
      %p130 = por %p128, %p129
      %p131 = scmp.ne.s32.totalorder %s120, %s121
      %p132 = scmp.eq.s32.totalorder %s23, 0
      %p133 = por %p131, %p132
      %p134 = scmp.ne.s32.totalorder %s120, %s121
      %p135 = scmp.eq.s32.totalorder %s24, 1
      %p136 = por %p134, %p135
      %p138 = scmp.ne.s32.totalorder %s121, %s137
      %p139 = scmp.eq.s32.totalorder %s24, 0
      %p140 = por %p138, %p139
      %p141 = scmp.le.s32.totalorder 1, %s18
      %p142 = scmp.lt.s32.totalorder %s18, 3
      %p143 = pnand %p141, %p142
      %p144 = pneg %p143
      // Predicated region
      $region9: #{vivit_embeddings.2} parent=5 // pred_check
        _
      $region10: #{vivit_embeddings.2} parent=5 // pred_check_branch
        %146 = sbr.rel (%p143) target = $region12
      $region11: #{vivit_embeddings.2} parent=5 // pred_region
        %s147 = ssub.s32 %s18, 1
        // Predicated region
        $region13: #{vivit_embeddings.2} parent=11 // pred_check
          %p148 = pneg %p79
        $region14: #{vivit_embeddings.2} parent=11 // pred_check_branch
          %150 = sbr.rel (%p148) target = $region16
        $region15: #{vivit_embeddings.2} parent=11 // pred_region
          _
        $region16: #{vivit_embeddings.2} parent=11 // pred_fallthru
          _
        // Predicated region
        $region17: #{vivit_embeddings.2} parent=11 // pred_check
          %p151 = pneg %p105
        $region18: #{vivit_embeddings.2} parent=11 // pred_check_branch
          %153 = sbr.rel (%p151) target = $region20
        $region19: #{vivit_embeddings.2} parent=11 // pred_region
          %s154 = smul.u32 4, %s27
          %p155 = scmp.lt.s32.totalorder %s154, 3
          %s156 = scalar_select %p155, %s154, 3
          %s157 = smul.addr %s156, 4
          %s158 = scalar_lea.vmem %s1, %s157
          %s159 = smul.u32 4, %s27
        $region20: #{vivit_embeddings.2} parent=11 // pred_fallthru
          _
      $region12: #{vivit_embeddings.2} parent=5 // pred_fallthru
        _
      %p160 = scmp.lt.s32.totalorder %s18, 2
      // Predicated region
      $region21: #{vivit_embeddings.2} parent=5 // pred_check
        %p161 = pneg %p160
      $region22: #{vivit_embeddings.2} parent=5 // pred_check_branch
        %163 = sbr.rel (%p161) target = $region24
      $region23: #{vivit_embeddings.2} parent=5 // pred_region
        // Predicated region
        $region25: #{vivit_embeddings.2} parent=23 // pred_check
          %p164 = pneg %p52
        $region26: #{vivit_embeddings.2} parent=23 // pred_check_branch
          %166 = sbr.rel (%p164) target = $region28
        $region27: #{vivit_embeddings.2} parent=23 // pred_region
          %s167 = smul.u32 4, %s25
          %p168 = scmp.lt.s32.totalorder %s26, 1
          %s169 = scalar_select %p168, %s26, 1
          %p170 = scmp.lt.s32.totalorder %s167, 3
          %s171 = scalar_select %p170, %s167, 3
          %s172 = smul.addr %s169, 4
          %s173 = sadd.s32 %s171, %s172
          %s174 = smul.addr %s173, 4
          %s175 = scalar_lea.vmem %s2, %s174
          %s176 = smul.u32 4, %s25
        $region28: #{vivit_embeddings.2} parent=23 // pred_fallthru
          _
      $region24: #{vivit_embeddings.2} parent=5 // pred_fallthru
        _
      %p177 = scmp.le.s32.totalorder 1, %s18
      %p178 = scmp.lt.s32.totalorder %s18, 3
      %p179 = pnand %p177, %p178
      %p180 = pneg %p179
      // Predicated region
      $region29: #{vivit_embeddings.2} parent=5 // pred_check
        _
      $region30: #{vivit_embeddings.2} parent=5 // pred_check_branch
        %182 = sbr.rel (%p179) target = $region32
      $region31: #{vivit_embeddings.2} parent=5 // pred_region
        #allocation9 [shape = 'u8[8192]{0}', space=vmem, size = 0x2000, dematerialized = true, scoped, tag = 'FusionAdapter Buffer %fusion.1 = bf16[2,32,128]{2,1,0:T(8,128)(2,1)} fusion(%param_2.1, %param_3), kind=kLoop, calls=%fused_computation.2.clone, metadata={op_name="jit(vivit_embeddings)/jit(_pad)/pad" stack_frame_id=11}']
        %s183 = ssub.s32 %s18, 1
        %s184 = smul.u32 4, %s27
        %p185 = scmp.lt.s32.totalorder %s28, 1
        %s186 = scalar_select %p185, %s28, 1
        %p187 = scmp.lt.s32.totalorder %s184, 3
        %s188 = scalar_select %p187, %s184, 3
        %s189 = smul.addr %s186, 4
        %s190 = sadd.s32 %s188, %s189
        %s191 = smul.addr %s190, 4
        %s192 = scalar_lea.vmem %s2, %s191
        %p193 = pneg %p58
        %p194 = pneg %p55
        %p195 = pneg %p79
        %p196 = pneg %p76
        %s197 = smul.u32 4, %s27
        %p198 = scmp.lt.s32.totalorder %s197, 3
        %s199 = scalar_select %p198, %s197, 3
        %s200 = smul.addr %s199, 4
        %s201 = scalar_lea.vmem %s1, %s200
        %p202 = pneg %p105
        %p203 = pneg %p102
        %p204 = pneg %p133
        %p205 = pneg %p130
        %s206 = sand.u32 %s120, 1
        %s207 = scalar_lea.sflag [#allocation8], %s206
        %s208 = sand.u32 %s120, 1
        %s209 = smul.addr %s208, 32
        %s210 = scalar_lea.vmem [#allocation7], %s209
        %s211 = smul.u32 4, %s27
        %p212 = scmp.lt.s32.totalorder %s28, 1
        %s213 = scalar_select %p212, %s28, 1
        %p214 = scmp.lt.s32.totalorder %s211, 3
        %s215 = scalar_select %p214, %s211, 3
        %s216 = smul.addr %s213, 4
        %s217 = sadd.s32 %s215, %s216
        %s218 = smul.addr %s217, 4
        %s219 = scalar_lea.vmem %s2, %s218
        %s220 = smul.u32 4, %s27
        %s221 = smul.u32 4, %s27
        %p222 = scmp.lt.s32.totalorder %s221, 3
        %s223 = scalar_select %p222, %s221, 3
        %s224 = smul.addr %s223, 4
        %s225 = scalar_lea.vmem %s1, %s224
        %s226 = smul.u32 4, %s27
        %s227 = smul.u32 4, %s27
        %s229 = sor.u32 255, 127
        %s230 = sand.u32 %s229, 85
        %s231 = sshrl.u32 %s230, 1
        %s232 = sor.u32 %s230, %s231
        %s233 = sand.u32 51, %s232
        %s234 = sshrl.u32 %s233, 2
        %s235 = sor.u32 %s233, %s234
        %s236 = sand.u32 15, %s235
        %v237 = vld [vmem:[%s219] sm:%s236]
        %v238 = vunpack.c.l.bf16 %v237
        %v239 = vunpack.c.h.bf16 %v237
        %v240 = vlaneseq
        %v241 = vand.u32 %v240, 127
        %vm243 = vcmp.lt.s32.totalorder %v241, 96
        %v244 = vsel %vm243, %v238, %v10
        %v245 = vpack.c.bf16 0.0, %v244
        %s247 = ssub.s32 16, 1
        %248 = vst [vmem:[#allocation9] sm:%s247] %v245
        %s249 = scalar_lea.vmem %s219, 4
        %s251 = sor.u32 255, 127
        %s252 = sand.u32 %s251, 85
        %s253 = sshrl.u32 %s252, 1
        %s254 = sor.u32 %s252, %s253
        %s255 = sand.u32 51, %s254
        %s256 = sshrl.u32 %s255, 2
        %s257 = sor.u32 %s255, %s256
        %s258 = sand.u32 15, %s257
        %v259 = vld [vmem:[%s249] sm:%s258]
        %v260 = vunpack.c.l.bf16 %v259
        %v261 = vunpack.c.h.bf16 %v259
        %v262 = vlaneseq
        %v263 = vand.u32 %v262, 127
        %vm265 = vcmp.lt.s32.totalorder %v263, 96
        %v266 = vsel %vm265, %v260, %v10
        %s267 = scalar_lea.vmem [#allocation9], 4
        %v268 = vpack.c.bf16 0.0, %v266
        %s270 = ssub.s32 16, 1
        %271 = vst [vmem:[%s267] sm:%s270] %v268
        %s272 = scalar_lea.vmem %s219, 8
        %s274 = sor.u32 255, 127
        %s275 = sand.u32 %s274, 85
        %s276 = sshrl.u32 %s275, 1
        %s277 = sor.u32 %s275, %s276
        %s278 = sand.u32 51, %s277
        %s279 = sshrl.u32 %s278, 2
        %s280 = sor.u32 %s278, %s279
        %s281 = sand.u32 15, %s280
        %v282 = vld [vmem:[%s272] sm:%s281]
        %v283 = vunpack.c.l.bf16 %v282
        %v284 = vunpack.c.h.bf16 %v282
        %v285 = vlaneseq
        %v286 = vand.u32 %v285, 127
        %vm288 = vcmp.lt.s32.totalorder %v286, 96
        %v289 = vsel %vm288, %v283, %v10
        %s290 = scalar_lea.vmem [#allocation9], 8
        %v291 = vpack.c.bf16 0.0, %v289
        %s293 = ssub.s32 16, 1
        %294 = vst [vmem:[%s290] sm:%s293] %v291
        %s295 = scalar_lea.vmem %s219, 12
        %s297 = sor.u32 255, 127
        %s298 = sand.u32 %s297, 85
        %s299 = sshrl.u32 %s298, 1
        %s300 = sor.u32 %s298, %s299
        %s301 = sand.u32 51, %s300
        %s302 = sshrl.u32 %s301, 2
        %s303 = sor.u32 %s301, %s302
        %s304 = sand.u32 15, %s303
        %v305 = vld [vmem:[%s295] sm:%s304]
        %v306 = vunpack.c.l.bf16 %v305
        %v307 = vunpack.c.h.bf16 %v305
        %v308 = vlaneseq
        %v309 = vand.u32 %v308, 127
        %vm311 = vcmp.lt.s32.totalorder %v309, 96
        %v312 = vsel %vm311, %v306, %v10
        %s313 = scalar_lea.vmem [#allocation9], 12
        %v314 = vpack.c.bf16 0.0, %v312
        %s316 = ssub.s32 16, 1
        %317 = vst [vmem:[%s313] sm:%s316] %v314
        %v318 = vld [vmem:[#allocation9] sm:$0xf]
        %v319 = vld [vmem:[#allocation9 + $0x4] sm:$0xf]
        %v320 = vld [vmem:[#allocation9 + $0x8] sm:$0xf]
        %v321 = vld [vmem:[#allocation9 + $0xc] sm:$0xf]
        %v322 = vld [vmem:[%s0] sm:$0xf]
        %v323 = vld [vmem:[%s0 + $0x4] sm:$0xf]
        %v324 = vld [vmem:[%s0 + $0x8] sm:$0xf]
        %v325 = vld [vmem:[%s0 + $0xc] sm:$0xf]
        %v326 = vld [vmem:[%s0 + $0x10] sm:$0xf]
        %v327 = vld [vmem:[%s0 + $0x14] sm:$0xf]
        %v328 = vld [vmem:[%s0 + $0x18] sm:$0xf]
        %v329 = vld [vmem:[%s0 + $0x1c] sm:$0xf]
        %v330 = vld [vmem:[%s0 + $0x20] sm:$0xf]
        %v331 = vld [vmem:[%s0 + $0x24] sm:$0xf]
        %v332 = vld [vmem:[%s0 + $0x28] sm:$0xf]
        %v333 = vld [vmem:[%s0 + $0x2c] sm:$0xf]
        %v334 = vld [vmem:[%s0 + $0x30] sm:$0xf]
        %v335 = vld [vmem:[%s0 + $0x34] sm:$0xf]
        %v336 = vld [vmem:[%s0 + $0x38] sm:$0xf]
        %v337 = vld [vmem:[%s0 + $0x3c] sm:$0xf]
        %v338 = vld [vmem:[%s225] sm:$0xf]
        %v339 = vld [vmem:[%s225 + $0x4] sm:$0xf]
        %v340 = vld [vmem:[%s225 + $0x8] sm:$0xf]
        %v341 = vld [vmem:[%s225 + $0xc] sm:$0xf]
        %v342 = vunpack.c.l.bf16 %v338
        %v343 = vunpack.c.l.bf16 %v339
        %v344 = vunpack.c.l.bf16 %v340
        %v345 = vunpack.c.l.bf16 %v341
        %v350 = vunpack.c.l.b16 %v318
        %v351 = vunpack.c.l.b16 %v319
        %v352 = vunpack.c.l.b16 %v320
        %v353 = vunpack.c.l.b16 %v321
        %v354 = vpack.c.b16 %v351, %v350
        %v355 = vpack.c.b16 %v353, %v352
        %v374 = vunpack.c.l.b16 %v322
        %v375 = vunpack.c.l.b16 %v323
        %v376 = vunpack.c.l.b16 %v324
        %v377 = vunpack.c.l.b16 %v325
        %v378 = vunpack.c.l.b16 %v326
        %v379 = vunpack.c.l.b16 %v327
        %v380 = vunpack.c.l.b16 %v328
        %v381 = vunpack.c.l.b16 %v329
        %v382 = vunpack.c.l.b16 %v330
        %v383 = vunpack.c.l.b16 %v331
        %v384 = vunpack.c.l.b16 %v332
        %v385 = vunpack.c.l.b16 %v333
        %v386 = vunpack.c.l.b16 %v334
        %v387 = vunpack.c.l.b16 %v335
        %v388 = vunpack.c.l.b16 %v336
        %v389 = vunpack.c.l.b16 %v337
        %v390 = vpack.c.b16 %v375, %v374
        %v391 = vpack.c.b16 %v377, %v376
        %v392 = vpack.c.b16 %v379, %v378
        %v393 = vpack.c.b16 %v381, %v380
        %v394 = vpack.c.b16 %v383, %v382
        %v395 = vpack.c.b16 %v385, %v384
        %v396 = vpack.c.b16 %v387, %v386
        %v397 = vpack.c.b16 %v389, %v388
        %406 = vmatpush.bf16.msra.mxu0 %v397
        %407 = vmatpush.bf16.msra.mxu0 %v396
        %408 = vmatpush.bf16.msra.mxu0 %v395
        %409 = vmatpush.bf16.msra.mxu0 %v394
        %410 = vmatpush.bf16.msra.mxu0 %v393
        %411 = vmatpush.bf16.msra.mxu0 %v392
        %412 = vmatpush.bf16.msra.mxu0 %v391
        %413 = vmatpush.bf16.msra.mxu0 %v390
        %414 = vmatmul.bf16.gmra.mxu0 %v354
        %v415 = vpop.f32.mrf.mxu0
        %v416 = vadd.f32 %v342, %v415
        %v417 = vpop.f32.mrf.mxu0
        %v418 = vadd.f32 %v343, %v417
        %419 = vmatmul.bf16.gmra.mxu0 %v355
        %v420 = vpop.f32.mrf.mxu0
        %v421 = vadd.f32 %v344, %v420
        %v422 = vpop.f32.mrf.mxu0
        %v423 = vadd.f32 %v345, %v422
        %424 = vdwg.mxu0
        %425 = vst [vmem:[%s210] sm:$0xff] %v416
        %426 = vst [vmem:[%s210 + $0x8] sm:$0xff] %v418
        %427 = vst [vmem:[%s210 + $0x10] sm:$0xff] %v421
        %428 = vst [vmem:[%s210 + $0x18] sm:$0xff] %v423
        %s429 = sand.u32 %s120, 1
        %s430 = scalar_lea.sflag [#allocation8], %s429
        %s431 = sand.u32 %s120, 1
        %s432 = smul.addr %s431, 32
        %s433 = scalar_lea.vmem [#allocation7], %s432
        // Predicated region
        $region33: #{vivit_embeddings.2} parent=31 // pred_check
          %p434 = pneg %p130
        $region34: #{vivit_embeddings.2} parent=31 // pred_check_branch
          %436 = sbr.rel (%p434) target = $region36
        $region35: #{vivit_embeddings.2} parent=31 // pred_region
          %s437 = smul.u32 4, %s27
          %439 = vsyncadd %s430, 0
          %s440 = smul.addr %s28, 4
          %s441 = sadd.s32 %s437, %s440
          %s442 = smul.addr %s441, 8
          %s443 = scalar_lea.hbm %s4, %s442
          %s444 = sshll.u32 %s433, 4
          %s445 = int_to_ptr.vmem [resolvable:$true] %s444
          %s446 = sshll.u32 %s443, 4
          %s447 = int_to_ptr.hbm [resolvable:$true] %s446
          %452 = dma.vmem_to_hbm [thread:$0]  %s445, 512, %s447, %s430, 128, 128, 8
        $region36: #{vivit_embeddings.2} parent=31 // pred_fallthru
          _
      $region32: #{vivit_embeddings.2} parent=5 // pred_fallthru
        _
      %p453 = scmp.le.s32.totalorder 2, %s18
      // Predicated region
      $region37: #{vivit_embeddings.2} parent=5 // pred_check
        %p454 = pneg %p453
      $region38: #{vivit_embeddings.2} parent=5 // pred_check_branch
        %456 = sbr.rel (%p454) target = $region40
      $region39: #{vivit_embeddings.2} parent=5 // pred_region
        %s457 = ssub.s32 %s18, 2
        // Predicated region
        $region41: #{vivit_embeddings.2} parent=39 // pred_check
          %p458 = pneg %p136
        $region42: #{vivit_embeddings.2} parent=39 // pred_check_branch
          %460 = sbr.rel (%p458) target = $region44
        $region43: #{vivit_embeddings.2} parent=39 // pred_region
          %s461 = sand.u32 %s121, 1
          %s462 = scalar_lea.sflag [#allocation8], %s461
          %s463 = sand.u32 %s121, 1
          %s464 = smul.addr %s463, 32
          %s465 = scalar_lea.vmem [#allocation7], %s464
          %467 = dma.done %s462, 512
        $region44: #{vivit_embeddings.2} parent=39 // pred_fallthru
          _
      $region40: #{vivit_embeddings.2} parent=5 // pred_fallthru
        _
    $region6: #{vivit_embeddings.2} parent=1 // loop_footer
      %s22 = sadd.s32 1, %s18
    $region7: #{vivit_embeddings.2} parent=1 // loop_footer_branch
      %17 = sbr.rel target = $region3
    $region8: #{vivit_embeddings.2} parent=1 // loop_exit
      _
    %468 = vsyncpa [#allocation8], 1
    %s469 = scalar_lea.sflag [#allocation8], 1
    %470 = vsyncpa %s469, 1

</llo_original>
